<compile_context>
chip_gen: v7x
topology: tpu7x:2x2x1
jax: 0.10.0
libtpu: 0.0.40
codegen_flags: <defaults>
</compile_context>

<pallas_src>
import jax
import jax.numpy as jnp
from jax.experimental import pallas as pl
from jax.experimental.pallas import tpu as pltpu


def _window_mapper_kernel(x_ref, w1_ref, b1_ref, w2_ref, b2_ref, o_ref):
    # Per grid step (one window):
    #   x_ref : (1, in_dim)            bf16   (shared across windows, DMA'd once)
    #   w1_ref: (in_dim, hidden)       bf16
    #   b1_ref: (1, hidden)            f32
    #   w2_ref: (hidden, out_dim_pad)  bf16   (out_dim zero-padded to a 128 multiple)
    #   b2_ref: (1, out_dim_pad)       f32
    #   o_ref : (1, out_dim_pad)       f32    (lane-dense, unmasked store)
    x = x_ref[...]
    h = jnp.dot(x, w1_ref[...], preferred_element_type=jnp.float32) + b1_ref[...]
    h = jnp.maximum(h, 0.0)                                   # hidden-layer ReLU
    y = jnp.dot(h.astype(w2_ref.dtype), w2_ref[...],
                preferred_element_type=jnp.float32) + b2_ref[...]
    o_ref[...] = jnp.maximum(y, 0.0)                          # F.relu on window_adj


def prepare_mapper_params(W1, b1, W2, b2):
    """One-time parameter preparation (call at load time, NOT per forward):
       * cast weight matrices to bf16 (halves weight DMA / VMEM; MXU-native operand),
       * zero-pad the per-window output dim up to a multiple of 128 so the kernel's
         output store is lane-dense / unmasked (padding is exact zeros -> relu(0)=0),
       * reshape biases to (W, 1, dim) so every BlockSpec block equals full array dims.
    """
    window_num, in_dim, hidden = W1.shape
    out_dim = W2.shape[-1]
    out_pad = (-out_dim) % 128
    out_dim_p = out_dim + out_pad

    W2p = jnp.pad(W2, ((0, 0), (0, 0), (0, out_pad)))
    b2p = jnp.pad(b2, ((0, 0), (0, out_pad)))

    return {
        "W1": W1.astype(jnp.bfloat16),                                   # (W, in_dim, hidden)
        "b1": b1.reshape(window_num, 1, hidden).astype(jnp.float32),     # (W, 1, hidden)
        "W2": W2p.astype(jnp.bfloat16),                                  # (W, hidden, out_dim_p)
        "b2": b2p.reshape(window_num, 1, out_dim_p).astype(jnp.float32), # (W, 1, out_dim_p)
        "out_dim": out_dim,
        "out_dim_padded": out_dim_p,
    }


def windows_graph_mapper(global_adj, params, node_num):
    """
    global_adj: (node_num, node_num) float32
    params: output of prepare_mapper_params (prepared once, reused every call)
    Returns a stacked array of shape (window_num, node_num, node_num)
    (equivalent to the original list: list(result) recovers per-window matrices).
    """
    W1, b1, W2, b2 = params["W1"], params["b1"], params["W2"], params["b2"]
    window_num, in_dim, hidden = W1.shape
    out_dim = params["out_dim"]
    out_dim_p = params["out_dim_padded"]

    x = global_adj.reshape(1, in_dim).astype(jnp.bfloat16)

    cost = pl.CostEstimate(
        flops=2 * window_num * (in_dim * hidden + hidden * out_dim_p),
        transcendentals=0,
        bytes_accessed=(x.size * 2          # bf16 activations
                        + W1.size * 2 + W2.size * 2     # bf16 weights
                        + b1.size * 4 + b2.size * 4     # f32 biases
                        + window_num * out_dim_p * 4),  # f32 output
    )

    out = pl.pallas_call(
        _window_mapper_kernel,
        out_shape=jax.ShapeDtypeStruct((window_num, 1, out_dim_p), jnp.float32),
        grid=(window_num,),
        in_specs=[
            # x: same block for every window -> DMA'd once, stays resident in VMEM.
            pl.BlockSpec((1, in_dim), lambda w: (0, 0)),
            # Per-window weight / bias tiles (window dim squeezed out of the kernel view).
            pl.BlockSpec((None, in_dim, hidden), lambda w: (w, 0, 0)),
            pl.BlockSpec((None, 1, hidden), lambda w: (w, 0, 0)),
            pl.BlockSpec((None, hidden, out_dim_p), lambda w: (w, 0, 0)),
            pl.BlockSpec((None, 1, out_dim_p), lambda w: (w, 0, 0)),
        ],
        out_specs=pl.BlockSpec((None, 1, out_dim_p), lambda w: (w, 0, 0)),
        compiler_params=pltpu.CompilerParams(
            # Windows are independent: shard across v7x's 2 TensorCores (no-op on v5e/v6e).
            dimension_semantics=("parallel",),
        ),
        cost_estimate=cost,
    )(x, W1, b1, W2, b2)

    # Strip lane padding and present per-window adjacency matrices.
    out = out.reshape(window_num, out_dim_p)[:, :out_dim]
    return out.reshape(window_num, node_num, node_num)


def _init_params(key, window_num, in_dim, hidden, out_dim):
    """Deterministic PyTorch-Linear-style init (uniform +-1/sqrt(fan_in)), fp32."""
    k1, k2, k3, k4 = jax.random.split(key, 4)
    bound1 = 1.0 / jnp.sqrt(in_dim)
    bound2 = 1.0 / jnp.sqrt(hidden)
    W1 = jax.random.uniform(k1, (window_num, in_dim, hidden),
                            minval=-bound1, maxval=bound1, dtype=jnp.float32)
    b1 = jax.random.uniform(k2, (window_num, hidden),
                            minval=-bound1, maxval=bound1, dtype=jnp.float32)
    W2 = jax.random.uniform(k3, (window_num, hidden, out_dim),
                            minval=-bound2, maxval=bound2, dtype=jnp.float32)
    b2 = jax.random.uniform(k4, (window_num, out_dim),
                            minval=-bound2, maxval=bound2, dtype=jnp.float32)
    return W1, b1, W2, b2


if __name__ == "__main__":
    node_num = 8
    window_num = 4
    hidden_dim = 32
    in_dim = node_num * node_num        # 64 (flattened global adjacency)
    out_dim = node_num * node_num       # 64

    key = jax.random.PRNGKey(0)
    k_adj, k_params = jax.random.split(key)
    global_adj = jax.random.uniform(k_adj, (node_num, node_num), dtype=jnp.float32)
    W1, b1, W2, b2 = _init_params(k_params, window_num, in_dim, hidden_dim, out_dim)

    # One-time parameter preparation (NOT part of the per-call path).
    params = prepare_mapper_params(W1, b1, W2, b2)

    window_adj = windows_graph_mapper(global_adj, params, node_num)
    window_adj = jax.block_until_ready(window_adj)

    # Reference check: replicate the kernel's bf16-operand / fp32-accumulate math
    # exactly in plain JAX (tight tolerance), plus a loose sanity check vs pure fp32.
    xb = global_adj.reshape(-1).astype(jnp.bfloat16).astype(jnp.float32)
    ok = True
    max_diff_fp32 = 0.0
    for w in range(window_num):
        W1b = W1[w].astype(jnp.bfloat16).astype(jnp.float32)
        W2b = W2[w].astype(jnp.bfloat16).astype(jnp.float32)
        h = jnp.maximum(xb @ W1b + b1[w], 0.0)
        hb = h.astype(jnp.bfloat16).astype(jnp.float32)
        ref = jnp.maximum(hb @ W2b + b2[w], 0.0).reshape(node_num, node_num)
        ok = ok and bool(jnp.allclose(window_adj[w], ref, atol=1e-4, rtol=1e-4))

        h32 = jnp.maximum(global_adj.reshape(-1) @ W1[w] + b1[w], 0.0)
        ref32 = jnp.maximum(h32 @ W2[w] + b2[w], 0.0).reshape(node_num, node_num)
        max_diff_fp32 = max(max_diff_fp32, float(jnp.abs(window_adj[w] - ref32).max()))

    assert ok, "Pallas output mismatch vs bf16-operand reference"
    assert max_diff_fp32 < 5e-2, f"Pallas output too far from fp32 reference: {max_diff_fp32}"
    print("KERNEL_OK")
</pallas_src>

<mosaic_0001>
module attributes {stable_mosaic.version = 11 : i64} {
  func.func @_window_mapper_kernel(%arg0: i32, %arg1: memref<1x64xbf16, #tpu.memory_space<vmem>>, %arg2: memref<1x64x32xbf16, #tpu.memory_space<vmem>>, %arg3: memref<1x1x32xf32, #tpu.memory_space<vmem>>, %arg4: memref<1x32x128xbf16, #tpu.memory_space<vmem>>, %arg5: memref<1x1x128xf32, #tpu.memory_space<vmem>>, %arg6: memref<1x1x128xf32, #tpu.memory_space<vmem>>) attributes {dimension_semantics = [#tpu.dimension_semantics<parallel>], iteration_bounds = array<i64: 4>, scalar_prefetch = 0 : i64, scratch_operands = 0 : i64, tpu.core_type = #tpu.core_type<tc>, window_params = [{pipeline_mode = #tpu.pipeline_mode<synchronous>, transform_indices = @transform_0, window_bounds = array<i64: 1, 64>}, {transform_indices = @transform_1, window_bounds = array<i64: 1, 64, 32>}, {transform_indices = @transform_2, window_bounds = array<i64: 1, 1, 32>}, {transform_indices = @transform_3, window_bounds = array<i64: 1, 32, 128>}, {transform_indices = @transform_4, window_bounds = array<i64: 1, 1, 128>}, {transform_indices = @transform_5, window_bounds = array<i64: 1, 1, 128>}]} {
    %c0 = arith.constant 0 : index
    %c0_0 = arith.constant 0 : index
    %0 = vector.load %arg1[%c0, %c0_0] : memref<1x64xbf16, #tpu.memory_space<vmem>>, vector<1x64xbf16>
    %c0_1 = arith.constant 0 : index
    %c0_2 = arith.constant 0 : index
    %c0_3 = arith.constant 0 : index
    %1 = vector.load %arg2[%c0_1, %c0_2, %c0_3] : memref<1x64x32xbf16, #tpu.memory_space<vmem>>, vector<1x64x32xbf16>
    %2 = vector.shape_cast %1 : vector<1x64x32xbf16> to vector<64x32xbf16>
    %cst = arith.constant dense<0.000000e+00> : vector<1x32xf32>
    %3 = tpu.matmul %0, %2, %cst {dimension_numbers = #tpu.dot_dimension_numbers<[1], [0], [0], [1], [0, 0, 1, 1], [], []>} : vector<1x64xbf16>, vector<64x32xbf16>, vector<1x32xf32> -> vector<1x32xf32>
    %c0_4 = arith.constant 0 : index
    %c0_5 = arith.constant 0 : index
    %c0_6 = arith.constant 0 : index
    %4 = vector.load %arg3[%c0_4, %c0_5, %c0_6] : memref<1x1x32xf32, #tpu.memory_space<vmem>>, vector<1x1x32xf32>
    %5 = vector.shape_cast %4 : vector<1x1x32xf32> to vector<1x32xf32>
    %6 = arith.addf %3, %5 : vector<1x32xf32>
    %cst_7 = arith.constant 0.000000e+00 : f32
    %7 = vector.broadcast %cst_7 : f32 to vector<1x32xf32>
    %8 = arith.maximumf %6, %7 : vector<1x32xf32>
    %9 = arith.truncf %8 : vector<1x32xf32> to vector<1x32xbf16>
    %c0_8 = arith.constant 0 : index
    %c0_9 = arith.constant 0 : index
    %c0_10 = arith.constant 0 : index
    %10 = vector.load %arg4[%c0_8, %c0_9, %c0_10] : memref<1x32x128xbf16, #tpu.memory_space<vmem>>, vector<1x32x128xbf16>
    %11 = vector.shape_cast %10 : vector<1x32x128xbf16> to vector<32x128xbf16>
    %cst_11 = arith.constant dense<0.000000e+00> : vector<1x128xf32>
    %12 = tpu.matmul %9, %11, %cst_11 {dimension_numbers = #tpu.dot_dimension_numbers<[1], [0], [0], [1], [0, 0, 1, 1], [], []>} : vector<1x32xbf16>, vector<32x128xbf16>, vector<1x128xf32> -> vector<1x128xf32>
    %c0_12 = arith.constant 0 : index
    %c0_13 = arith.constant 0 : index
    %c0_14 = arith.constant 0 : index
    %13 = vector.load %arg5[%c0_12, %c0_13, %c0_14] : memref<1x1x128xf32, #tpu.memory_space<vmem>>, vector<1x1x128xf32>
    %14 = vector.shape_cast %13 : vector<1x1x128xf32> to vector<1x128xf32>
    %15 = arith.addf %12, %14 : vector<1x128xf32>
    %cst_15 = arith.constant 0.000000e+00 : f32
    %16 = vector.broadcast %cst_15 : f32 to vector<1x128xf32>
    %17 = arith.maximumf %15, %16 : vector<1x128xf32>
    %c0_16 = arith.constant 0 : index
    %c0_17 = arith.constant 0 : index
    %c0_18 = arith.constant 0 : index
    %18 = vector.load %arg6[%c0_16, %c0_17, %c0_18] : memref<1x1x128xf32, #tpu.memory_space<vmem>>, vector<1x1x128xf32>
    %19 = vector.shape_cast %18 : vector<1x1x128xf32> to vector<1x128xf32>
    %20 = vector.shape_cast %17 : vector<1x128xf32> to vector<1x1x128xf32>
    tpu.vector_store %arg6[%c0_16, %c0_17, %c0_18], %20 {strides = array<i32>} : memref<1x1x128xf32, #tpu.memory_space<vmem>>, vector<1x1x128xf32>,
    return
  }
  func.func @transform_0(%arg0: i32) -> (i32, i32) {
    %c0_i32 = arith.constant 0 : i32
    %c0_i32_0 = arith.constant 0 : i32
    %c0_i32_1 = arith.constant 0 : i32
    return %c0_i32, %c0_i32_0 : i32, i32
  }
  func.func @transform_1(%arg0: i32) -> (i32, i32, i32) {
    %c0_i32 = arith.constant 0 : i32
    %c0_i32_0 = arith.constant 0 : i32
    %c0_i32_1 = arith.constant 0 : i32
    return %arg0, %c0_i32, %c0_i32_0 : i32, i32, i32
  }
  func.func @transform_2(%arg0: i32) -> (i32, i32, i32) {
    %c0_i32 = arith.constant 0 : i32
    %c0_i32_0 = arith.constant 0 : i32
    %c0_i32_1 = arith.constant 0 : i32
    return %arg0, %c0_i32, %c0_i32_0 : i32, i32, i32
  }
  func.func @transform_3(%arg0: i32) -> (i32, i32, i32) {
    %c0_i32 = arith.constant 0 : i32
    %c0_i32_0 = arith.constant 0 : i32
    %c0_i32_1 = arith.constant 0 : i32
    return %arg0, %c0_i32, %c0_i32_0 : i32, i32, i32
  }
  func.func @transform_4(%arg0: i32) -> (i32, i32, i32) {
    %c0_i32 = arith.constant 0 : i32
    %c0_i32_0 = arith.constant 0 : i32
    %c0_i32_1 = arith.constant 0 : i32
    return %arg0, %c0_i32, %c0_i32_0 : i32, i32, i32
  }
  func.func @transform_5(%arg0: i32) -> (i32, i32, i32) {
    %c0_i32 = arith.constant 0 : i32
    %c0_i32_0 = arith.constant 0 : i32
    %c0_i32_1 = arith.constant 0 : i32
    return %arg0, %c0_i32, %c0_i32_0 : i32, i32, i32
  }
}

</mosaic_0001>

<llo_original>
// kernel: tpu_custom_call.1
$region0: #{tpu_custom_call.1}
  #allocation0 [shape = 'u32[]', space=smem, size = 0x4, offset = 0x4, fixed_abs, tag = 'smem constant byte address 0x4 - core index']
  #allocation1 [shape = 'u32[144,128]{1,0:T(1,128)}', space=vmem, size = 0x12000, scoped, tag = 'internal scratch']
  %s0 = inlined_call_operand.vmem [shape: bf16[1,64], index: 0, kind: input, shape index: {}]
  %s1 = inlined_call_operand.vmem [shape: bf16[4,64,32], index: 1, kind: input, shape index: {}]
  %s2 = inlined_call_operand.vmem [shape: f32[4,1,32], index: 2, kind: input, shape index: {}]
  %s3 = inlined_call_operand.vmem [shape: bf16[4,32,128], index: 3, kind: input, shape index: {}]
  %s4 = inlined_call_operand.vmem [shape: f32[4,1,128], index: 4, kind: input, shape index: {}]
  %s5 = inlined_call_operand.hbm [shape: f32[4,1,128], index: 5, kind: output, shape index: {}]
  %s6 = sld [smem:[#allocation0]]
  $region53: #{tpu_custom_call.1} parent=0
    _
  %s8 = ssub.s32 1, %s6
  %s9 = scalar_select 0, %s8, %s6
  $region1: #{tpu_custom_call.1} parent=0
    #allocation2 [shape = 'u8[1024]{0}', space=vmem, size = 0x400, scoped, tag = 'output window, operand 0']
    #allocation3 [shape = 's32[2]{0}', space=sflag, size = 0x8, scoped, tag = 'scoped memory for tpu_custom_call.1']
    %10 = vsyncpa [#allocation3], 0
    %s11 = scalar_lea.sflag [#allocation3], 1
    %12 = vsyncpa %s11, 0
    loop: start=0, step=1, limit=6
    $region2: #{tpu_custom_call.1} parent=1 // loop_pre_header
      _
    $region3: #{tpu_custom_call.1} parent=1 // loop_header
      %s14 = sphi 0, %s18
      %p15 = scmp.ge.s32.totalorder %s14, 6
      %s22 = sphi 0, %s22
      %s24 = sphi 0, %s22
      %s25 = sphi 0, %s24
      %s39 = sphi 0, %s25
      %s45 = sphi 0, %s47
      %s48 = sphi 0, %s45
      %s49 = sphi 0, %s48
      %s65 = sphi 0, %s49
      %s71 = sphi 0, %s73
      %s74 = sphi 0, %s71
      %s75 = sphi 0, %s74
      %s91 = sphi 0, %s75
      %s97 = sphi 0, %s99
      %s100 = sphi 0, %s97
      %s101 = sphi 0, %s100
      %s117 = sphi 0, %s101
      %s123 = sphi 0, %s125
      %s126 = sphi 0, %s123
      %s127 = sphi 0, %s126
      %s143 = sphi 0, %s127
      %s149 = sphi 0, %s151
      %s152 = sphi 0, %s149
      %s153 = sphi 0, %s152
      %s169 = sphi 0, %s153
    $region4: #{tpu_custom_call.1} parent=1 // loop_header_branch
      %17 = sbr.rel (%p15) target = $region8
    $region5: #{tpu_custom_call.1} parent=1 // loop_body
      %s19 = ssub.s32 %s14, 1
      %s20 = ssub.s32 %s14, 2
      %s21 = sadd.s32 %s14, 1
      %s23 = sadd.s32 %s22, 1
      %p26 = scmp.eq.s32.totalorder %s14, 3
      %p27 = scmp.ne.s32.totalorder %s22, %s24
      %p28 = scmp.eq.s32.totalorder %s14, 0
      %p29 = por %p27, %p28
      %p30 = scmp.ne.s32.totalorder %s22, %s24
      %p31 = scmp.eq.s32.totalorder %s19, 3
      %p32 = por %p30, %p31
      %p33 = scmp.ne.s32.totalorder %s24, %s25
      %p34 = scmp.eq.s32.totalorder %s19, 0
      %p35 = por %p33, %p34
      %p36 = scmp.ne.s32.totalorder %s24, %s25
      %p37 = scmp.eq.s32.totalorder %s20, 3
      %p38 = por %p36, %p37
      %p40 = scmp.ne.s32.totalorder %s25, %s39
      %p41 = scmp.eq.s32.totalorder %s20, 0
      %p42 = por %p40, %p41
      %s43 = ssub.s32 %s14, %s21
      %p44 = scmp.eq.s32.totalorder %s43, 0
      %s46 = sadd.s32 %s45, 1
      %s47 = scalar_select %p44, %s45, %s46
      %p50 = pneg %p44
      %p51 = scmp.eq.s32.totalorder %s14, 3
      %p52 = por %p50, %p51
      %p53 = scmp.ne.s32.totalorder %s45, %s48
      %p54 = scmp.eq.s32.totalorder %s14, 0
      %p55 = por %p53, %p54
      %p56 = scmp.ne.s32.totalorder %s45, %s48
      %p57 = scmp.eq.s32.totalorder %s19, 3
      %p58 = por %p56, %p57
      %p59 = scmp.ne.s32.totalorder %s48, %s49
      %p60 = scmp.eq.s32.totalorder %s19, 0
      %p61 = por %p59, %p60
      %p62 = scmp.ne.s32.totalorder %s48, %s49
      %p63 = scmp.eq.s32.totalorder %s20, 3
      %p64 = por %p62, %p63
      %p66 = scmp.ne.s32.totalorder %s49, %s65
      %p67 = scmp.eq.s32.totalorder %s20, 0
      %p68 = por %p66, %p67
      %s69 = ssub.s32 %s14, %s21
      %p70 = scmp.eq.s32.totalorder %s69, 0
      %s72 = sadd.s32 %s71, 1
      %s73 = scalar_select %p70, %s71, %s72
      %p76 = pneg %p70
      %p77 = scmp.eq.s32.totalorder %s14, 3
      %p78 = por %p76, %p77
      %p79 = scmp.ne.s32.totalorder %s71, %s74
      %p80 = scmp.eq.s32.totalorder %s14, 0
      %p81 = por %p79, %p80
      %p82 = scmp.ne.s32.totalorder %s71, %s74
      %p83 = scmp.eq.s32.totalorder %s19, 3
      %p84 = por %p82, %p83
      %p85 = scmp.ne.s32.totalorder %s74, %s75
      %p86 = scmp.eq.s32.totalorder %s19, 0
      %p87 = por %p85, %p86
      %p88 = scmp.ne.s32.totalorder %s74, %s75
      %p89 = scmp.eq.s32.totalorder %s20, 3
      %p90 = por %p88, %p89
      %p92 = scmp.ne.s32.totalorder %s75, %s91
      %p93 = scmp.eq.s32.totalorder %s20, 0
      %p94 = por %p92, %p93
      %s95 = ssub.s32 %s14, %s21
      %p96 = scmp.eq.s32.totalorder %s95, 0
      %s98 = sadd.s32 %s97, 1
      %s99 = scalar_select %p96, %s97, %s98
      %p102 = pneg %p96
      %p103 = scmp.eq.s32.totalorder %s14, 3
      %p104 = por %p102, %p103
      %p105 = scmp.ne.s32.totalorder %s97, %s100
      %p106 = scmp.eq.s32.totalorder %s14, 0
      %p107 = por %p105, %p106
      %p108 = scmp.ne.s32.totalorder %s97, %s100
      %p109 = scmp.eq.s32.totalorder %s19, 3
      %p110 = por %p108, %p109
      %p111 = scmp.ne.s32.totalorder %s100, %s101
      %p112 = scmp.eq.s32.totalorder %s19, 0
      %p113 = por %p111, %p112
      %p114 = scmp.ne.s32.totalorder %s100, %s101
      %p115 = scmp.eq.s32.totalorder %s20, 3
      %p116 = por %p114, %p115
      %p118 = scmp.ne.s32.totalorder %s101, %s117
      %p119 = scmp.eq.s32.totalorder %s20, 0
      %p120 = por %p118, %p119
      %s121 = ssub.s32 %s14, %s21
      %p122 = scmp.eq.s32.totalorder %s121, 0
      %s124 = sadd.s32 %s123, 1
      %s125 = scalar_select %p122, %s123, %s124
      %p128 = pneg %p122
      %p129 = scmp.eq.s32.totalorder %s14, 3
      %p130 = por %p128, %p129
      %p131 = scmp.ne.s32.totalorder %s123, %s126
      %p132 = scmp.eq.s32.totalorder %s14, 0
      %p133 = por %p131, %p132
      %p134 = scmp.ne.s32.totalorder %s123, %s126
      %p135 = scmp.eq.s32.totalorder %s19, 3
      %p136 = por %p134, %p135
      %p137 = scmp.ne.s32.totalorder %s126, %s127
      %p138 = scmp.eq.s32.totalorder %s19, 0
      %p139 = por %p137, %p138
      %p140 = scmp.ne.s32.totalorder %s126, %s127
      %p141 = scmp.eq.s32.totalorder %s20, 3
      %p142 = por %p140, %p141
      %p144 = scmp.ne.s32.totalorder %s127, %s143
      %p145 = scmp.eq.s32.totalorder %s20, 0
      %p146 = por %p144, %p145
      %s147 = ssub.s32 %s14, %s21
      %p148 = scmp.eq.s32.totalorder %s147, 0
      %s150 = sadd.s32 %s149, 1
      %s151 = scalar_select %p148, %s149, %s150
      %p154 = pneg %p148
      %p155 = scmp.eq.s32.totalorder %s14, 3
      %p156 = por %p154, %p155
      %p157 = scmp.ne.s32.totalorder %s149, %s152
      %p158 = scmp.eq.s32.totalorder %s14, 0
      %p159 = por %p157, %p158
      %p160 = scmp.ne.s32.totalorder %s149, %s152
      %p161 = scmp.eq.s32.totalorder %s19, 3
      %p162 = por %p160, %p161
      %p163 = scmp.ne.s32.totalorder %s152, %s153
      %p164 = scmp.eq.s32.totalorder %s19, 0
      %p165 = por %p163, %p164
      %p166 = scmp.ne.s32.totalorder %s152, %s153
      %p167 = scmp.eq.s32.totalorder %s20, 3
      %p168 = por %p166, %p167
      %p170 = scmp.ne.s32.totalorder %s153, %s169
      %p171 = scmp.eq.s32.totalorder %s20, 0
      %p172 = por %p170, %p171
      %p173 = scmp.le.s32.totalorder 1, %s14
      %p174 = scmp.lt.s32.totalorder %s14, 5
      %p175 = pnand %p173, %p174
      %p176 = pneg %p175
      // Predicated region
      $region9: #{tpu_custom_call.1} parent=5 // pred_check
        _
      $region10: #{tpu_custom_call.1} parent=5 // pred_check_branch
        %178 = sbr.rel (%p175) target = $region12
      $region11: #{tpu_custom_call.1} parent=5 // pred_region
        %s179 = ssub.s32 %s14, 1
        // Predicated region
        $region13: #{tpu_custom_call.1} parent=11 // pred_check
          %p180 = pneg %p35
        $region14: #{tpu_custom_call.1} parent=11 // pred_check_branch
          %182 = sbr.rel (%p180) target = $region16
        $region15: #{tpu_custom_call.1} parent=11 // pred_region
          _
        $region16: #{tpu_custom_call.1} parent=11 // pred_fallthru
          _
      $region12: #{tpu_custom_call.1} parent=5 // pred_fallthru
        _
      %p183 = scmp.lt.s32.totalorder %s14, 4
      // Predicated region
      $region17: #{tpu_custom_call.1} parent=5 // pred_check
        %p184 = pneg %p183
      $region18: #{tpu_custom_call.1} parent=5 // pred_check_branch
        %186 = sbr.rel (%p184) target = $region20
      $region19: #{tpu_custom_call.1} parent=5 // pred_region
        // Predicated region
        $region21: #{tpu_custom_call.1} parent=19 // pred_check
          %p187 = pneg %p55
        $region22: #{tpu_custom_call.1} parent=19 // pred_check_branch
          %189 = sbr.rel (%p187) target = $region24
        $region23: #{tpu_custom_call.1} parent=19 // pred_region
          %p190 = scmp.lt.s32.totalorder %s14, 3
          %s191 = scalar_select %p190, %s14, 3
          %s192 = smul.addr %s191, 8
          %s193 = smul.addr %s192, 4
          %s194 = scalar_lea.vmem %s1, %s193
        $region24: #{tpu_custom_call.1} parent=19 // pred_fallthru
          _
        // Predicated region
        $region25: #{tpu_custom_call.1} parent=19 // pred_check
          %p195 = pneg %p81
        $region26: #{tpu_custom_call.1} parent=19 // pred_check_branch
          %197 = sbr.rel (%p195) target = $region28
        $region27: #{tpu_custom_call.1} parent=19 // pred_region
          %p198 = scmp.lt.s32.totalorder %s14, 3
          %s199 = scalar_select %p198, %s14, 3
          %s200 = scalar_lea.vmem %s2, %s199
        $region28: #{tpu_custom_call.1} parent=19 // pred_fallthru
          _
        // Predicated region
        $region29: #{tpu_custom_call.1} parent=19 // pred_check
          %p201 = pneg %p107
        $region30: #{tpu_custom_call.1} parent=19 // pred_check_branch
          %203 = sbr.rel (%p201) target = $region32
        $region31: #{tpu_custom_call.1} parent=19 // pred_region
          %p204 = scmp.lt.s32.totalorder %s14, 3
          %s205 = scalar_select %p204, %s14, 3
          %s206 = smul.addr %s205, 4
          %s207 = smul.addr %s206, 4
          %s208 = scalar_lea.vmem %s3, %s207
        $region32: #{tpu_custom_call.1} parent=19 // pred_fallthru
          _
        // Predicated region
        $region33: #{tpu_custom_call.1} parent=19 // pred_check
          %p209 = pneg %p133
        $region34: #{tpu_custom_call.1} parent=19 // pred_check_branch
          %211 = sbr.rel (%p209) target = $region36
        $region35: #{tpu_custom_call.1} parent=19 // pred_region
          %p212 = scmp.lt.s32.totalorder %s14, 3
          %s213 = scalar_select %p212, %s14, 3
          %s214 = scalar_lea.vmem %s4, %s213
        $region36: #{tpu_custom_call.1} parent=19 // pred_fallthru
          _
      $region20: #{tpu_custom_call.1} parent=5 // pred_fallthru
        _
      %p215 = scmp.le.s32.totalorder 1, %s14
      %p216 = scmp.lt.s32.totalorder %s14, 5
      %p217 = pnand %p215, %p216
      %p218 = pneg %p217
      // Predicated region
      $region37: #{tpu_custom_call.1} parent=5 // pred_check
        _
      $region38: #{tpu_custom_call.1} parent=5 // pred_check_branch
        %220 = sbr.rel (%p217) target = $region40
      $region39: #{tpu_custom_call.1} parent=5 // pred_region
        %s221 = ssub.s32 %s14, 1
        %p222 = pneg %p35
        %p223 = pneg %p32
        %p224 = scmp.lt.s32.totalorder %s19, 3
        %s225 = scalar_select %p224, %s19, 3
        %s226 = smul.addr %s225, 8
        %s227 = smul.addr %s226, 4
        %s228 = scalar_lea.vmem %s1, %s227
        %p229 = pneg %p61
        %p230 = pneg %p58
        %p231 = scmp.lt.s32.totalorder %s19, 3
        %s232 = scalar_select %p231, %s19, 3
        %s233 = scalar_lea.vmem %s2, %s232
        %p234 = pneg %p87
        %p235 = pneg %p84
        %p236 = scmp.lt.s32.totalorder %s19, 3
        %s237 = scalar_select %p236, %s19, 3
        %s238 = smul.addr %s237, 4
        %s239 = smul.addr %s238, 4
        %s240 = scalar_lea.vmem %s3, %s239
        %p241 = pneg %p113
        %p242 = pneg %p110
        %p243 = scmp.lt.s32.totalorder %s19, 3
        %s244 = scalar_select %p243, %s19, 3
        %s245 = scalar_lea.vmem %s4, %s244
        %p246 = pneg %p139
        %p247 = pneg %p136
        %p248 = pneg %p165
        %p249 = pneg %p162
        %s250 = sand.u32 %s152, 1
        %s251 = scalar_lea.sflag [#allocation3], %s250
        %s252 = sand.u32 %s152, 1
        %s253 = scalar_lea.vmem [#allocation2], %s252
        %p254 = scmp.lt.s32.totalorder %s19, 3
        %s255 = scalar_select %p254, %s19, 3
        %s256 = smul.addr %s255, 8
        %s257 = smul.addr %s256, 4
        %s258 = scalar_lea.vmem %s1, %s257
        %p259 = scmp.lt.s32.totalorder %s19, 3
        %s260 = scalar_select %p259, %s19, 3
        %s261 = scalar_lea.vmem %s2, %s260
        %p262 = scmp.lt.s32.totalorder %s19, 3
        %s263 = scalar_select %p262, %s19, 3
        %s264 = smul.addr %s263, 4
        %s265 = smul.addr %s264, 4
        %s266 = scalar_lea.vmem %s3, %s265
        %p267 = scmp.lt.s32.totalorder %s19, 3
        %s268 = scalar_select %p267, %s19, 3
        %s269 = scalar_lea.vmem %s4, %s268
        %v271 = vld [vmem:[%s0] sm:$0x1]
        %v272 = vld [vmem:[%s258] sm:$0xf]
        %v273 = vld [vmem:[%s258 + $0x4] sm:$0xf]
        %v274 = vld [vmem:[%s258 + $0x8] sm:$0xf]
        %v275 = vld [vmem:[%s258 + $0xc] sm:$0xf]
        %v276 = vld [vmem:[%s258 + $0x10] sm:$0xf]
        %v277 = vld [vmem:[%s258 + $0x14] sm:$0xf]
        %v278 = vld [vmem:[%s258 + $0x18] sm:$0xf]
        %v279 = vld [vmem:[%s258 + $0x1c] sm:$0xf]
        %v280 = vld [vmem:[%s261] sm:$0x1]
        %v289 = vunpack.c.l.b16 %v272
        %v290 = vunpack.c.l.b16 %v273
        %v291 = vunpack.c.l.b16 %v274
        %v292 = vunpack.c.l.b16 %v275
        %v293 = vunpack.c.l.b16 %v276
        %v294 = vunpack.c.l.b16 %v277
        %v295 = vunpack.c.l.b16 %v278
        %v296 = vunpack.c.l.b16 %v279
        %v297 = vpack.c.b16 %v290, %v289
        %v298 = vpack.c.b16 %v292, %v291
        %v299 = vpack.c.b16 %v294, %v293
        %v300 = vpack.c.b16 %v296, %v295
        %vm305 = vcmask 523264
        %v307 = vsel %vm305, %v271, 0
        %309 = vmatprep.subr.bf16.mxu0 0
        %310 = vmatpush1.bf16.msra.mxu0 %v297
        %311 = vmatprep.subr.bf16.mxu0 0
        %312 = vmatpush1.bf16.msra.mxu0 %v298
        %313 = vmatprep.subr.bf16.mxu0 0
        %314 = vmatpush1.bf16.msra.mxu0 %v299
        %315 = vmatprep.subr.bf16.mxu0 0
        %316 = vmatpush1.bf16.msra.mxu0 %v300
        %317 = vmatprep.subr.bf16.mxu0 0
        %318 = vmatpush1.bf16.msra.mxu0 0
        %319 = vmatprep.subr.bf16.mxu0 0
        %320 = vmatpush1.bf16.msra.mxu0 0
        %321 = vmatprep.subr.bf16.mxu0 0
        %322 = vmatpush1.bf16.msra.mxu0 0
        %323 = vmatprep.subr.bf16.mxu0 0
        %324 = vmatpush1.bf16.msra.mxu0 0
        %325 = vmatprep.subr.bf16.mxu0 0
        %326 = vmatpush1.bf16.msra.mxu0 0
        %327 = vmatprep.subr.bf16.mxu0 0
        %328 = vmatpush1.bf16.msra.mxu0 0
        %329 = vmatprep.subr.bf16.mxu0 0
        %330 = vmatpush1.bf16.msra.mxu0 0
        %331 = vmatprep.subr.bf16.mxu0 0
        %332 = vmatpush1.bf16.msra.mxu0 0
        %333 = vmatprep.subr.bf16.mxu0 0
        %334 = vmatpush1.bf16.msra.mxu0 0
        %335 = vmatprep.subr.bf16.mxu0 0
        %336 = vmatpush1.bf16.msra.mxu0 0
        %337 = vmatprep.subr.bf16.mxu0 0
        %338 = vmatpush1.bf16.msra.mxu0 0
        %339 = vmatprep.subr.bf16.mxu0 0
        %340 = vmatpush1.bf16.msra.mxu0 0
        %341 = vmatprep.mubr.bf16.mxu0 0
        %342 = vmatmul.mubr.bf16.gmra.mrb[0].mxu0 %v307
        %v343 = vpop.f32.mrb[0].mxu0
        %v344 = vadd.f32 %v280, %v343
        %v345 = vpop.f32.mrb[0].mxu0
        %v346 = vpop.f32.mrb[0].mxu0
        %v347 = vpop.f32.mrb[0].mxu0
        %348 = vdwg.mxu0
        %v349 = vmax.f32 %v344, 0.0
        %v350 = vpack.c.bf16 %v349, %v349
        %v351 = vld [vmem:[%s266] sm:$0xf]
        %v352 = vld [vmem:[%s266 + $0x4] sm:$0xf]
        %v353 = vld [vmem:[%s266 + $0x8] sm:$0xf]
        %v354 = vld [vmem:[%s266 + $0xc] sm:$0xf]
        %v355 = vld [vmem:[%s269] sm:$0x1]
        %v360 = vunpack.c.l.b16 %v351
        %v361 = vunpack.c.l.b16 %v352
        %v362 = vunpack.c.l.b16 %v353
        %v363 = vunpack.c.l.b16 %v354
        %v364 = vpack.c.b16 %v361, %v360
        %v365 = vpack.c.b16 %v363, %v362
        %vm368 = vcmask 261120
        %v370 = vsel %vm368, %v350, 0
        %372 = vmatprep.subr.bf16.mxu0 0
        %373 = vmatpush1.bf16.msra.mxu0 %v364
        %374 = vmatprep.subr.bf16.mxu0 0
        %375 = vmatpush1.bf16.msra.mxu0 %v365
        %376 = vmatprep.subr.bf16.mxu0 0
        %377 = vmatpush1.bf16.msra.mxu0 0
        %378 = vmatprep.subr.bf16.mxu0 0
        %379 = vmatpush1.bf16.msra.mxu0 0
        %380 = vmatprep.subr.bf16.mxu0 0
        %381 = vmatpush1.bf16.msra.mxu0 0
        %382 = vmatprep.subr.bf16.mxu0 0
        %383 = vmatpush1.bf16.msra.mxu0 0
        %384 = vmatprep.subr.bf16.mxu0 0
        %385 = vmatpush1.bf16.msra.mxu0 0
        %386 = vmatprep.subr.bf16.mxu0 0
        %387 = vmatpush1.bf16.msra.mxu0 0
        %388 = vmatprep.subr.bf16.mxu0 0
        %389 = vmatpush1.bf16.msra.mxu0 0
        %390 = vmatprep.subr.bf16.mxu0 0
        %391 = vmatpush1.bf16.msra.mxu0 0
        %392 = vmatprep.subr.bf16.mxu0 0
        %393 = vmatpush1.bf16.msra.mxu0 0
        %394 = vmatprep.subr.bf16.mxu0 0
        %395 = vmatpush1.bf16.msra.mxu0 0
        %396 = vmatprep.subr.bf16.mxu0 0
        %397 = vmatpush1.bf16.msra.mxu0 0
        %398 = vmatprep.subr.bf16.mxu0 0
        %399 = vmatpush1.bf16.msra.mxu0 0
        %400 = vmatprep.subr.bf16.mxu0 0
        %401 = vmatpush1.bf16.msra.mxu0 0
        %402 = vmatprep.subr.bf16.mxu0 0
        %403 = vmatpush1.bf16.msra.mxu0 0
        %404 = vmatprep.mubr.bf16.mxu0 0
        %405 = vmatmul.mubr.bf16.gmra.mrb[0].mxu0 %v370
        %v406 = vpop.f32.mrb[0].mxu0
        %v407 = vadd.f32 %v355, %v406
        %v408 = vpop.f32.mrb[0].mxu0
        %v409 = vpop.f32.mrb[0].mxu0
        %v410 = vpop.f32.mrb[0].mxu0
        %411 = vdwg.mxu0
        %v412 = vmax.f32 %v407, 0.0
        %413 = vst [vmem:[%s253] sm:$0x1] %v412
        %s414 = sand.u32 %s152, 1
        %s415 = scalar_lea.sflag [#allocation3], %s414
        %s416 = sand.u32 %s152, 1
        %s417 = scalar_lea.vmem [#allocation2], %s416
        // Predicated region
        $region41: #{tpu_custom_call.1} parent=39 // pred_check
          %p418 = pneg %p162
        $region42: #{tpu_custom_call.1} parent=39 // pred_check_branch
          %420 = sbr.rel (%p418) target = $region44
        $region43: #{tpu_custom_call.1} parent=39 // pred_region
          %s422 = ssub.s32 16, 16
          %423 = vsyncadd %s415, %s422
          %s424 = smul.addr %s19, 16
          %s425 = scalar_lea.hbm %s5, %s424
          %s427 = sshll.u32 %s417, 4
          %s428 = int_to_ptr.vmem [resolvable:$true] %s427
          %430 = dma.vmem_to_hbm [thread:$0]  %s428, 16, %s425, %s415
        $region44: #{tpu_custom_call.1} parent=39 // pred_fallthru
          _
      $region40: #{tpu_custom_call.1} parent=5 // pred_fallthru
        _
      %p431 = scmp.le.s32.totalorder 2, %s14
      // Predicated region
      $region45: #{tpu_custom_call.1} parent=5 // pred_check
        %p432 = pneg %p431
      $region46: #{tpu_custom_call.1} parent=5 // pred_check_branch
        %434 = sbr.rel (%p432) target = $region48
      $region47: #{tpu_custom_call.1} parent=5 // pred_region
        %s435 = ssub.s32 %s14, 2
        // Predicated region
        $region49: #{tpu_custom_call.1} parent=47 // pred_check
          %p436 = pneg %p168
        $region50: #{tpu_custom_call.1} parent=47 // pred_check_branch
          %438 = sbr.rel (%p436) target = $region52
        $region51: #{tpu_custom_call.1} parent=47 // pred_region
          %s439 = sand.u32 %s153, 1
          %s440 = scalar_lea.sflag [#allocation3], %s439
          %s441 = sand.u32 %s153, 1
          %s442 = scalar_lea.vmem [#allocation2], %s441
          %443 = dma.done %s440, 16
        $region52: #{tpu_custom_call.1} parent=47 // pred_fallthru
          _
      $region48: #{tpu_custom_call.1} parent=5 // pred_fallthru
        _
    $region6: #{tpu_custom_call.1} parent=1 // loop_footer
      %s18 = sadd.s32 1, %s14
    $region7: #{tpu_custom_call.1} parent=1 // loop_footer_branch
      %13 = sbr.rel target = $region3
    $region8: #{tpu_custom_call.1} parent=1 // loop_exit
      _
    %444 = vsyncpa [#allocation3], 1
    %s445 = scalar_lea.sflag [#allocation3], 1
    %446 = vsyncpa %s445, 1

</llo_original>
